<compile_context>
chip_gen: v7x
topology: tpu7x:2x2x1
jax: 0.10.0
libtpu: 0.0.40
codegen_flags: <defaults>
</compile_context>

<pallas_src>
import functools

import jax
import jax.numpy as jnp
from jax.experimental import pallas as pl
from jax.experimental.pallas import tpu as pltpu


def _round_up(x, m):
    return ((x + m - 1) // m) * m


def _tpu_caps():
    """(vmem_capacity_bytes, mxu_dim, has_bf16_valu) with safe fallbacks."""
    vmem_cap = 64 << 20          # conservative (v7x per-TC VMEM)
    mxu_dim = 128
    bf16_valu = False
    try:
        vmem_cap = int(pltpu.get_tpu_info().vmem_capacity_bytes)
    except Exception:
        pass
    try:
        kind = jax.devices()[0].device_kind.lower()
        if any(tag in kind for tag in ("v6", "v7", "trillium")):
            mxu_dim = 256        # 256x256 MXU generations
            bf16_valu = True
    except Exception:
        pass
    return vmem_cap, mxu_dim, bf16_valu


def _align_dim(n, mxu_dim):
    # Full MXU-tile fill: pad to 256 on 256x256-MXU chips when the dim is
    # already >= 256; otherwise 128 (lane width / v5e MXU).
    base = 256 if (mxu_dim == 256 and n >= 256) else 128
    return _round_up(n, base)


# ---------------------------------------------------------------------------
# Fused kernel: whole network for one (TM, K) token tile.
# ---------------------------------------------------------------------------
def _explanation_kernel(num_layers, bf16_chain, unroll,
                        x_ref,
                        w_emb_ref, b_emb_ref,
                        w_attn_ref, b_attn_ref,
                        w_ff_ref, b_ff_ref,
                        w_out_ref, b_out_ref,
                        o_ref):
    """x_ref: (TM, K)  any float dtype (cast to bf16 here)
       weights: bf16 (K,H)/(H,H)/(H,C), biases f32 (1,H)/(1,C)
       o_ref: (TM, C)"""
    x = x_ref[...].astype(jnp.bfloat16)
    w_attn = w_attn_ref[...]
    w_ff = w_ff_ref[...]

    tm = x.shape[0]
    hidden = w_attn.shape[1]

    # embedding_layer: bf16 MXU inputs, f32 accumulate
    h32 = jnp.dot(x, w_emb_ref[...],
                  preferred_element_type=jnp.float32) + b_emb_ref[...]

    if bf16_chain:
        # v6e/v7x small-H path: residual/bias/ReLU chain in bf16 (packed VALU).
        b_attn_b = jnp.broadcast_to(b_attn_ref[...].astype(jnp.bfloat16),
                                    (tm, hidden))
        b_ff_b = jnp.broadcast_to(b_ff_ref[...].astype(jnp.bfloat16),
                                  (tm, hidden))
        h = h32.astype(jnp.bfloat16)

        def layer(_, h):
            attn = jnp.dot(h, w_attn,
                           preferred_element_type=jnp.float32).astype(jnp.bfloat16)
            h = jnp.maximum(h + (attn + b_attn_b), 0)
            ff = jnp.dot(h, w_ff,
                         preferred_element_type=jnp.float32).astype(jnp.bfloat16)
            h = jnp.maximum(h + (ff + b_ff_b), 0)
            return h

        h = jax.lax.fori_loop(0, num_layers, layer, h, unroll=unroll)
        out = jnp.dot(h, w_out_ref[...],
                      preferred_element_type=jnp.float32) + b_out_ref[...]
    else:
        # f32 chain (v5e / large H): hoist bias broadcasts out of the loop.
        b_attn_b = jnp.broadcast_to(b_attn_ref[...], (tm, hidden))
        b_ff_b = jnp.broadcast_to(b_ff_ref[...], (tm, hidden))
        h = h32

        def layer(_, h):
            attn = jnp.dot(h.astype(jnp.bfloat16), w_attn,
                           preferred_element_type=jnp.float32) + b_attn_b
            h = jnp.maximum(h + attn, 0.0)
            ff = jnp.dot(h.astype(jnp.bfloat16), w_ff,
                         preferred_element_type=jnp.float32) + b_ff_b
            h = jnp.maximum(h + ff, 0.0)
            return h

        h = jax.lax.fori_loop(0, num_layers, layer, h, unroll=unroll)
        out = jnp.dot(h.astype(jnp.bfloat16), w_out_ref[...],
                      preferred_element_type=jnp.float32) + b_out_ref[...]

    o_ref[...] = out.astype(o_ref.dtype)


# ---------------------------------------------------------------------------
# Weight-streaming fallback: one linear (+ optional residual/ReLU) per call.
# ---------------------------------------------------------------------------
def _linear_kernel(residual_relu, x_ref, w_ref, b_ref, o_ref):
    x = x_ref[...]
    y = jnp.dot(x.astype(jnp.bfloat16), w_ref[...],
                preferred_element_type=jnp.float32) + b_ref[...]
    if residual_relu:
        y = jnp.maximum(x.astype(jnp.float32) + y, 0.0)
    o_ref[...] = y.astype(o_ref.dtype)


def _linear_call(x2d, w, b, *, residual_relu, out_dtype, tm, vmem_cap):
    mp, k = x2d.shape
    n = w.shape[1]
    if residual_relu:
        assert k == n, "residual requires square weight"
    footprint = (w.size * w.dtype.itemsize + b.size * 4
                 + 2 * tm * k * x2d.dtype.itemsize
                 + 2 * tm * n * jnp.dtype(out_dtype).itemsize
                 + 4 * tm * n * 4)
    vmem_limit = int(min(0.85 * vmem_cap,
                         max(1.25 * footprint + (2 << 20), 16 << 20)))
    return pl.pallas_call(
        functools.partial(_linear_kernel, residual_relu),
        out_shape=jax.ShapeDtypeStruct((mp, n), out_dtype),
        grid=(mp // tm,),
        in_specs=[
            pl.BlockSpec((tm, k), lambda i: (i, 0)),                 # pipelined tokens
            pl.BlockSpec(memory_space=pltpu.MemorySpace.VMEM),       # resident weight
            pl.BlockSpec(memory_space=pltpu.MemorySpace.VMEM),       # resident bias
        ],
        out_specs=pl.BlockSpec((tm, n), lambda i: (i, 0)),
        compiler_params=pltpu.CompilerParams(
            dimension_semantics=("parallel",),
            vmem_limit_bytes=vmem_limit,
        ),
    )(x2d, w, b)


# ---------------------------------------------------------------------------
# Wrapper
# ---------------------------------------------------------------------------
def explanation_generator_forward(x, params, num_layers, *, tm=None,
                                  out_dtype=jnp.float32,
                                  force_streaming=False):
    """x: (batch, seq, input_size) float32 -> (batch, seq, num_classes) out_dtype."""
    batch, seq, input_size = x.shape
    hidden = params["w_emb"].shape[1]
    num_classes = params["w_out"].shape[1]
    M = batch * seq

    vmem_cap, mxu_dim, bf16_valu = _tpu_caps()

    # MXU / lane aligned padded dims.
    K = _align_dim(input_size, mxu_dim)
    H = _align_dim(hidden, mxu_dim)
    C = _align_dim(num_classes, mxu_dim)

    # Generation-aware token tile; keep >= 4 grid steps when M allows so both
    # v7x TensorCores get work and DMA/compute still overlap.
    if tm is None:
        tm = 256 if vmem_cap <= (64 << 20) else 512
    TM = min(tm, _round_up(M, 8))
    while TM > 8 and pl.cdiv(M, TM) < 4:
        TM = max(8, _round_up(TM // 2, 8))
    Mp = _round_up(M, TM)
    grid = (Mp // TM,)

    # Token slab: skip the host-side pad/cast round trip when already aligned
    # (the kernel casts to bf16 itself); otherwise pad + cast in one pass.
    x2d = x.reshape(M, input_size)
    if Mp == M and K == input_size:
        x_in = x2d
    else:
        x_in = jnp.pad(x2d, ((0, Mp - M), (0, K - input_size))).astype(jnp.bfloat16)

    def pad_w(w, r, c):
        return jnp.pad(w, ((0, r - w.shape[0]), (0, c - w.shape[1]))).astype(jnp.bfloat16)

    def pad_b(b, c):
        return jnp.pad(b, ((0, 0), (0, c - b.shape[1]))).astype(jnp.float32)

    w_emb = pad_w(params["w_emb"], K, H)
    b_emb = pad_b(params["b_emb"], H)
    w_attn = pad_w(params["w_attn"], H, H)
    b_attn = pad_b(params["b_attn"], H)
    w_ff = pad_w(params["w_ff"], H, H)
    b_ff = pad_b(params["b_ff"], H)
    w_out = pad_w(params["w_out"], H, C)
    b_out = pad_b(params["b_out"], C)

    bf16_chain = bf16_valu and H <= 256
    unroll = num_layers <= 4 and TM * H * 4 <= (1 << 20)

    # --- VMEM accounting (weights single-buffered, I/O tiles double-buffered) ---
    weight_bytes = 2 * (K * H + 2 * H * H + H * C) + 4 * (3 * H + C)
    io_bytes = (2 * TM * K * x_in.dtype.itemsize
                + 2 * TM * C * jnp.dtype(out_dtype).itemsize)
    tmp_bytes = 6 * TM * H * (2 if bf16_chain else 4)
    fused_footprint = weight_bytes + io_bytes + tmp_bytes
    use_fused = (not force_streaming) and fused_footprint <= int(0.75 * vmem_cap)

    if use_fused:
        vmem_limit = int(min(0.85 * vmem_cap,
                             max(1.25 * fused_footprint + (2 << 20), 16 << 20)))

        flops = 2 * Mp * (K * H + 2 * num_layers * H * H + H * C)
        bytes_accessed = int(
            x_in.size * x_in.dtype.itemsize
            + (w_emb.size + w_attn.size + w_ff.size + w_out.size) * 2
            + (b_emb.size + b_attn.size + b_ff.size + b_out.size) * 4
            + Mp * C * jnp.dtype(out_dtype).itemsize)
        cost = pl.CostEstimate(flops=int(flops), transcendentals=0,
                               bytes_accessed=bytes_accessed)

        kernel = functools.partial(_explanation_kernel, num_layers, bf16_chain, unroll)
        resident = pl.BlockSpec(memory_space=pltpu.MemorySpace.VMEM)

        out = pl.pallas_call(
            kernel,
            out_shape=jax.ShapeDtypeStruct((Mp, C), out_dtype),
            grid=grid,
            in_specs=[
                pl.BlockSpec((TM, K), lambda i: (i, 0)),  # token tile, pipelined over M
                resident, resident,                       # embedding w/b (whole-array VMEM)
                resident, resident,                       # cross_attention
                resident, resident,                       # feed_forward
                resident, resident,                       # output
            ],
            out_specs=pl.BlockSpec((TM, C), lambda i: (i, 0)),
            compiler_params=pltpu.CompilerParams(
                dimension_semantics=("parallel",),
                vmem_limit_bytes=vmem_limit,
            ),
            cost_estimate=cost,
        )(x_in, w_emb, b_emb, w_attn, b_attn, w_ff, b_ff, w_out, b_out)
    else:
        # Weight-streaming fallback: per-layer calls, one resident weight each,
        # bf16 intermediates in HBM.
        # TODO(synk): a single-call contraction-tiled (K-axis "arbitrary") variant
        # would avoid the HBM round trips between layers for very large H.
        h = _linear_call(x_in, w_emb, b_emb, residual_relu=False,
                         out_dtype=jnp.bfloat16, tm=TM, vmem_cap=vmem_cap)
        for _ in range(num_layers):
            h = _linear_call(h, w_attn, b_attn, residual_relu=True,
                             out_dtype=jnp.bfloat16, tm=TM, vmem_cap=vmem_cap)
            h = _linear_call(h, w_ff, b_ff, residual_relu=True,
                             out_dtype=jnp.bfloat16, tm=TM, vmem_cap=vmem_cap)
        out = _linear_call(h, w_out, b_out, residual_relu=False,
                           out_dtype=out_dtype, tm=TM, vmem_cap=vmem_cap)

    return out[:M, :num_classes].reshape(batch, seq, num_classes)


# ---------------------------------------------------------------------------
# Reference + init
# ---------------------------------------------------------------------------
def _reference_forward(x, params, num_layers):
    """Plain-JAX f32 reference matching the PyTorch module semantics."""
    h = x @ params["w_emb"] + params["b_emb"][0]
    for _ in range(num_layers):
        attn = h @ params["w_attn"] + params["b_attn"][0]
        h = jnp.maximum(h + attn, 0.0)
        ff = h @ params["w_ff"] + params["b_ff"][0]
        h = jnp.maximum(h + ff, 0.0)
    return h @ params["w_out"] + params["b_out"][0]


def _init_params(key, input_size, hidden_size, num_classes):
    ks = jax.random.split(key, 8)
    scale_in = 1.0 / jnp.sqrt(input_size)
    scale_h = 1.0 / jnp.sqrt(hidden_size)
    return {
        # weights stored (in_features, out_features)
        "w_emb":  jax.random.uniform(ks[0], (input_size, hidden_size),
                                     jnp.float32, -scale_in, scale_in),
        "b_emb":  jax.random.uniform(ks[1], (1, hidden_size),
                                     jnp.float32, -scale_in, scale_in),
        "w_attn": jax.random.uniform(ks[2], (hidden_size, hidden_size),
                                     jnp.float32, -scale_h, scale_h),
        "b_attn": jax.random.uniform(ks[3], (1, hidden_size),
                                     jnp.float32, -scale_h, scale_h),
        "w_ff":   jax.random.uniform(ks[4], (hidden_size, hidden_size),
                                     jnp.float32, -scale_h, scale_h),
        "b_ff":   jax.random.uniform(ks[5], (1, hidden_size),
                                     jnp.float32, -scale_h, scale_h),
        "w_out":  jax.random.uniform(ks[6], (hidden_size, num_classes),
                                     jnp.float32, -scale_h, scale_h),
        "b_out":  jax.random.uniform(ks[7], (1, num_classes),
                                     jnp.float32, -scale_h, scale_h),
    }


if __name__ == "__main__":
    # Small shapes consistent with the module's forward.
    batch, seq = 2, 8
    input_size, hidden_size, num_layers, num_classes = 16, 32, 2, 4

    key = jax.random.PRNGKey(0)
    key_x, key_p = jax.random.split(key)

    x = jax.random.normal(key_x, (batch, seq, input_size), dtype=jnp.float32)
    params = _init_params(key_p, input_size, hidden_size, num_classes)

    ref = _reference_forward(x, params, num_layers)

    # Fused (weights fully resident) path.
    out = jax.block_until_ready(explanation_generator_forward(x, params, num_layers))
    assert out.shape == (batch, seq, num_classes)
    # bf16 MXU inputs with f32 accumulation -> loosened tolerance vs. f32 reference.
    assert jnp.allclose(out, ref, atol=5e-2, rtol=5e-2), "fused kernel mismatch vs reference"

    # Exercise the weight-streaming fallback path as well.
    out_stream = jax.block_until_ready(
        explanation_generator_forward(x, params, num_layers, force_streaming=True))
    assert jnp.allclose(out_stream, ref, atol=5e-2, rtol=5e-2), "streaming path mismatch vs reference"

    print("KERNEL_OK")
</pallas_src>

<mosaic_0001>
module attributes {stable_mosaic.version = 11 : i64} {
  func.func @_explanation_kernel(%arg0: i32, %arg1: memref<8x128xbf16, #tpu.memory_space<vmem>>, %arg2: memref<128x128xbf16, #tpu.memory_space<vmem>>, %arg3: memref<1x128xf32, #tpu.memory_space<vmem>>, %arg4: memref<128x128xbf16, #tpu.memory_space<vmem>>, %arg5: memref<1x128xf32, #tpu.memory_space<vmem>>, %arg6: memref<128x128xbf16, #tpu.memory_space<vmem>>, %arg7: memref<1x128xf32, #tpu.memory_space<vmem>>, %arg8: memref<128x128xbf16, #tpu.memory_space<vmem>>, %arg9: memref<1x128xf32, #tpu.memory_space<vmem>>, %arg10: memref<8x128xf32, #tpu.memory_space<vmem>>) attributes {dimension_semantics = [#tpu.dimension_semantics<parallel>], iteration_bounds = array<i64: 2>, scalar_prefetch = 0 : i64, scratch_operands = 0 : i64, tpu.core_type = #tpu.core_type<tc>, window_params = [{transform_indices = @transform_0, window_bounds = array<i64: 8, 128>}, {pipeline_mode = #tpu.pipeline_mode<synchronous>, transform_indices = @transform_1, window_bounds = array<i64: 128, 128>}, {pipeline_mode = #tpu.pipeline_mode<synchronous>, transform_indices = @transform_2, window_bounds = array<i64: 1, 128>}, {pipeline_mode = #tpu.pipeline_mode<synchronous>, transform_indices = @transform_3, window_bounds = array<i64: 128, 128>}, {pipeline_mode = #tpu.pipeline_mode<synchronous>, transform_indices = @transform_4, window_bounds = array<i64: 1, 128>}, {pipeline_mode = #tpu.pipeline_mode<synchronous>, transform_indices = @transform_5, window_bounds = array<i64: 128, 128>}, {pipeline_mode = #tpu.pipeline_mode<synchronous>, transform_indices = @transform_6, window_bounds = array<i64: 1, 128>}, {pipeline_mode = #tpu.pipeline_mode<synchronous>, transform_indices = @transform_7, window_bounds = array<i64: 128, 128>}, {pipeline_mode = #tpu.pipeline_mode<synchronous>, transform_indices = @transform_8, window_bounds = array<i64: 1, 128>}, {transform_indices = @transform_9, window_bounds = array<i64: 8, 128>}]} {
    %c0 = arith.constant 0 : index
    %c0_0 = arith.constant 0 : index
    %0 = vector.load %arg1[%c0, %c0_0] : memref<8x128xbf16, #tpu.memory_space<vmem>>, vector<8x128xbf16>
    %c0_1 = arith.constant 0 : index
    %c0_2 = arith.constant 0 : index
    %1 = vector.load %arg4[%c0_1, %c0_2] : memref<128x128xbf16, #tpu.memory_space<vmem>>, vector<128x128xbf16>
    %c0_3 = arith.constant 0 : index
    %c0_4 = arith.constant 0 : index
    %2 = vector.load %arg6[%c0_3, %c0_4] : memref<128x128xbf16, #tpu.memory_space<vmem>>, vector<128x128xbf16>
    %c0_5 = arith.constant 0 : index
    %c0_6 = arith.constant 0 : index
    %3 = vector.load %arg2[%c0_5, %c0_6] : memref<128x128xbf16, #tpu.memory_space<vmem>>, vector<128x128xbf16>
    %cst = arith.constant dense<0.000000e+00> : vector<8x128xf32>
    %4 = tpu.matmul %0, %3, %cst {dimension_numbers = #tpu.dot_dimension_numbers<[1], [0], [0], [1], [0, 0, 1, 1], [], []>} : vector<8x128xbf16>, vector<128x128xbf16>, vector<8x128xf32> -> vector<8x128xf32>
    %c0_7 = arith.constant 0 : index
    %c0_8 = arith.constant 0 : index
    %5 = vector.load %arg3[%c0_7, %c0_8] : memref<1x128xf32, #tpu.memory_space<vmem>>, vector<1x128xf32>
    %6 = vector.broadcast %5 : vector<1x128xf32> to vector<8x128xf32>
    %7 = arith.addf %4, %6 : vector<8x128xf32>
    %c0_9 = arith.constant 0 : index
    %c0_10 = arith.constant 0 : index
    %8 = vector.load %arg5[%c0_9, %c0_10] : memref<1x128xf32, #tpu.memory_space<vmem>>, vector<1x128xf32>
    %9 = vector.shape_cast %8 : vector<1x128xf32> to vector<1x128xf32>
    %10 = vector.broadcast %9 : vector<1x128xf32> to vector<8x128xf32>
    %c0_11 = arith.constant 0 : index
    %c0_12 = arith.constant 0 : index
    %11 = vector.load %arg7[%c0_11, %c0_12] : memref<1x128xf32, #tpu.memory_space<vmem>>, vector<1x128xf32>
    %12 = vector.shape_cast %11 : vector<1x128xf32> to vector<1x128xf32>
    %13 = vector.broadcast %12 : vector<1x128xf32> to vector<8x128xf32>
    %c0_i32 = arith.constant 0 : i32
    %14 = arith.truncf %7 : vector<8x128xf32> to vector<8x128xbf16>
    %cst_13 = arith.constant dense<0.000000e+00> : vector<8x128xf32>
    %15 = tpu.matmul %14, %1, %cst_13 {dimension_numbers = #tpu.dot_dimension_numbers<[1], [0], [0], [1], [0, 0, 1, 1], [], []>} : vector<8x128xbf16>, vector<128x128xbf16>, vector<8x128xf32> -> vector<8x128xf32>
    %16 = arith.addf %15, %10 : vector<8x128xf32>
    %17 = arith.addf %7, %16 : vector<8x128xf32>
    %cst_14 = arith.constant 0.000000e+00 : f32
    %18 = vector.broadcast %cst_14 : f32 to vector<8x128xf32>
    %19 = arith.maximumf %17, %18 : vector<8x128xf32>
    %20 = arith.truncf %19 : vector<8x128xf32> to vector<8x128xbf16>
    %cst_15 = arith.constant dense<0.000000e+00> : vector<8x128xf32>
    %21 = tpu.matmul %20, %2, %cst_15 {dimension_numbers = #tpu.dot_dimension_numbers<[1], [0], [0], [1], [0, 0, 1, 1], [], []>} : vector<8x128xbf16>, vector<128x128xbf16>, vector<8x128xf32> -> vector<8x128xf32>
    %22 = arith.addf %21, %13 : vector<8x128xf32>
    %23 = arith.addf %19, %22 : vector<8x128xf32>
    %cst_16 = arith.constant 0.000000e+00 : f32
    %24 = vector.broadcast %cst_16 : f32 to vector<8x128xf32>
    %25 = arith.maximumf %23, %24 : vector<8x128xf32>
    %c1_i32 = arith.constant 1 : i32
    %26 = arith.truncf %25 : vector<8x128xf32> to vector<8x128xbf16>
    %cst_17 = arith.constant dense<0.000000e+00> : vector<8x128xf32>
    %27 = tpu.matmul %26, %1, %cst_17 {dimension_numbers = #tpu.dot_dimension_numbers<[1], [0], [0], [1], [0, 0, 1, 1], [], []>} : vector<8x128xbf16>, vector<128x128xbf16>, vector<8x128xf32> -> vector<8x128xf32>
    %28 = arith.addf %27, %10 : vector<8x128xf32>
    %29 = arith.addf %25, %28 : vector<8x128xf32>
    %cst_18 = arith.constant 0.000000e+00 : f32
    %30 = vector.broadcast %cst_18 : f32 to vector<8x128xf32>
    %31 = arith.maximumf %29, %30 : vector<8x128xf32>
    %32 = arith.truncf %31 : vector<8x128xf32> to vector<8x128xbf16>
    %cst_19 = arith.constant dense<0.000000e+00> : vector<8x128xf32>
    %33 = tpu.matmul %32, %2, %cst_19 {dimension_numbers = #tpu.dot_dimension_numbers<[1], [0], [0], [1], [0, 0, 1, 1], [], []>} : vector<8x128xbf16>, vector<128x128xbf16>, vector<8x128xf32> -> vector<8x128xf32>
    %34 = arith.addf %33, %13 : vector<8x128xf32>
    %35 = arith.addf %31, %34 : vector<8x128xf32>
    %cst_20 = arith.constant 0.000000e+00 : f32
    %36 = vector.broadcast %cst_20 : f32 to vector<8x128xf32>
    %37 = arith.maximumf %35, %36 : vector<8x128xf32>
    %38 = arith.truncf %37 : vector<8x128xf32> to vector<8x128xbf16>
    %c0_21 = arith.constant 0 : index
    %c0_22 = arith.constant 0 : index
    %39 = vector.load %arg8[%c0_21, %c0_22] : memref<128x128xbf16, #tpu.memory_space<vmem>>, vector<128x128xbf16>
    %cst_23 = arith.constant dense<0.000000e+00> : vector<8x128xf32>
    %40 = tpu.matmul %38, %39, %cst_23 {dimension_numbers = #tpu.dot_dimension_numbers<[1], [0], [0], [1], [0, 0, 1, 1], [], []>} : vector<8x128xbf16>, vector<128x128xbf16>, vector<8x128xf32> -> vector<8x128xf32>
    %c0_24 = arith.constant 0 : index
    %c0_25 = arith.constant 0 : index
    %41 = vector.load %arg9[%c0_24, %c0_25] : memref<1x128xf32, #tpu.memory_space<vmem>>, vector<1x128xf32>
    %42 = vector.broadcast %41 : vector<1x128xf32> to vector<8x128xf32>
    %43 = arith.addf %40, %42 : vector<8x128xf32>
    %c0_26 = arith.constant 0 : index
    %c0_27 = arith.constant 0 : index
    %44 = vector.load %arg10[%c0_26, %c0_27] : memref<8x128xf32, #tpu.memory_space<vmem>>, vector<8x128xf32>
    tpu.vector_store %arg10[%c0_26, %c0_27], %43 {strides = array<i32>} : memref<8x128xf32, #tpu.memory_space<vmem>>, vector<8x128xf32>,
    return
  }
  func.func @transform_0(%arg0: i32) -> (i32, i32) {
    %c0_i32 = arith.constant 0 : i32
    %c0_i32_0 = arith.constant 0 : i32
    return %arg0, %c0_i32 : i32, i32
  }
  func.func @transform_1(%arg0: i32) -> (i32, i32) {
    %c0_i32 = arith.constant 0 : i32
    %c0_i32_0 = arith.constant 0 : i32
    %c0_i32_1 = arith.constant 0 : i32
    return %c0_i32, %c0_i32_0 : i32, i32
  }
  func.func @transform_2(%arg0: i32) -> (i32, i32) {
    %c0_i32 = arith.constant 0 : i32
    %c0_i32_0 = arith.constant 0 : i32
    %c0_i32_1 = arith.constant 0 : i32
    return %c0_i32, %c0_i32_0 : i32, i32
  }
  func.func @transform_3(%arg0: i32) -> (i32, i32) {
    %c0_i32 = arith.constant 0 : i32
    %c0_i32_0 = arith.constant 0 : i32
    %c0_i32_1 = arith.constant 0 : i32
    return %c0_i32, %c0_i32_0 : i32, i32
  }
  func.func @transform_4(%arg0: i32) -> (i32, i32) {
    %c0_i32 = arith.constant 0 : i32
    %c0_i32_0 = arith.constant 0 : i32
    %c0_i32_1 = arith.constant 0 : i32
    return %c0_i32, %c0_i32_0 : i32, i32
  }
  func.func @transform_5(%arg0: i32) -> (i32, i32) {
    %c0_i32 = arith.constant 0 : i32
    %c0_i32_0 = arith.constant 0 : i32
    %c0_i32_1 = arith.constant 0 : i32
    return %c0_i32, %c0_i32_0 : i32, i32
  }
  func.func @transform_6(%arg0: i32) -> (i32, i32) {
    %c0_i32 = arith.constant 0 : i32
    %c0_i32_0 = arith.constant 0 : i32
    %c0_i32_1 = arith.constant 0 : i32
    return %c0_i32, %c0_i32_0 : i32, i32
  }
  func.func @transform_7(%arg0: i32) -> (i32, i32) {
    %c0_i32 = arith.constant 0 : i32
    %c0_i32_0 = arith.constant 0 : i32
    %c0_i32_1 = arith.constant 0 : i32
    return %c0_i32, %c0_i32_0 : i32, i32
  }
  func.func @transform_8(%arg0: i32) -> (i32, i32) {
    %c0_i32 = arith.constant 0 : i32
    %c0_i32_0 = arith.constant 0 : i32
    %c0_i32_1 = arith.constant 0 : i32
    return %c0_i32, %c0_i32_0 : i32, i32
  }
  func.func @transform_9(%arg0: i32) -> (i32, i32) {
    %c0_i32 = arith.constant 0 : i32
    %c0_i32_0 = arith.constant 0 : i32
    return %arg0, %c0_i32 : i32, i32
  }
}

</mosaic_0001>

<llo_original>
// kernel: tpu_custom_call.1
$region0: #{tpu_custom_call.1}
  #allocation0 [shape = 'u32[]', space=smem, size = 0x4, offset = 0x4, fixed_abs, tag = 'smem constant byte address 0x4 - core index']
  #allocation1 [shape = 'u32[144,128]{1,0:T(1,128)}', space=vmem, size = 0x12000, scoped, tag = 'internal scratch']
  %s0 = inlined_call_operand.hbm [shape: bf16[16,128], index: 0, kind: input, shape index: {}]
  %s1 = inlined_call_operand.hbm [shape: bf16[128,128], index: 1, kind: input, shape index: {}]
  %s2 = inlined_call_operand.vmem [shape: f32[1,128], index: 2, kind: input, shape index: {}]
  %s3 = inlined_call_operand.hbm [shape: bf16[128,128], index: 3, kind: input, shape index: {}]
  %s4 = inlined_call_operand.vmem [shape: f32[1,128], index: 4, kind: input, shape index: {}]
  %s5 = inlined_call_operand.hbm [shape: bf16[128,128], index: 5, kind: input, shape index: {}]
  %s6 = inlined_call_operand.vmem [shape: f32[1,128], index: 6, kind: input, shape index: {}]
  %s7 = inlined_call_operand.hbm [shape: bf16[128,128], index: 7, kind: input, shape index: {}]
  %s8 = inlined_call_operand.vmem [shape: f32[1,128], index: 8, kind: input, shape index: {}]
  %s9 = inlined_call_operand.hbm [shape: f32[16,128], index: 9, kind: output, shape index: {}]
  %s10 = sld [smem:[#allocation0]]
  $region89: #{tpu_custom_call.1} parent=0
    _
  %s12 = ssub.s32 1, %s10
  %s13 = scalar_select 0, %s12, %s10
  $region1: #{tpu_custom_call.1} parent=0
    #allocation2 [shape = 'u8[4096]{0}', space=vmem, size = 0x1000, scoped, tag = 'input window, operand 0']
    #allocation3 [shape = 's32[2]{0}', space=sflag, size = 0x8, scoped, tag = 'scoped memory for tpu_custom_call.1']
    #allocation4 [shape = 's32[2]{0}', space=sflag, size = 0x8, scoped, tag = 'scoped memory for tpu_custom_call.1']
    #allocation5 [shape = 'u8[32768]{0}', space=vmem, size = 0x8000, scoped, tag = 'input window, operand 1, single buffered']
    #allocation6 [shape = 's32[1]{0}', space=sflag, size = 0x4, scoped, tag = 'scoped memory for tpu_custom_call.1']
    #allocation7 [shape = 'u8[32768]{0}', space=vmem, size = 0x8000, scoped, tag = 'input window, operand 3, single buffered']
    #allocation8 [shape = 'u8[32768]{0}', space=vmem, size = 0x8000, scoped, tag = 'input window, operand 5, single buffered']
    #allocation9 [shape = 's32[1]{0}', space=sflag, size = 0x4, scoped, tag = 'scoped memory for tpu_custom_call.1']
    #allocation10 [shape = 'u8[32768]{0}', space=vmem, size = 0x8000, scoped, tag = 'input window, operand 7, single buffered']
    #allocation11 [shape = 'u8[8192]{0}', space=vmem, size = 0x2000, scoped, tag = 'output window, operand 0']
    %14 = vsyncpa [#allocation3], 0
    %s15 = scalar_lea.sflag [#allocation3], 1
    %16 = vsyncpa %s15, 0
    %17 = vsyncpa [#allocation6], 0
    %18 = vsyncpa [#allocation9], 0
    %19 = vsyncpa [#allocation4], 0
    %s20 = scalar_lea.sflag [#allocation4], 1
    %21 = vsyncpa %s20, 0
    loop: start=0, step=1, limit=4
    $region2: #{tpu_custom_call.1} parent=1 // loop_pre_header
      _
    $region3: #{tpu_custom_call.1} parent=1 // loop_header
      %s23 = sphi 0, %s27
      %p24 = scmp.ge.s32.totalorder %s23, 4
      %s33 = sphi 0, %s35
      %s36 = sphi 0, %s33
      %s37 = sphi 0, %s36
      %s53 = sphi 0, %s37
      %s57 = sphi 0, %s57
      %s59 = sphi 0, %s57
      %s60 = sphi 0, %s59
      %s74 = sphi 0, %s60
      %s78 = sphi 0, %s78
      %s80 = sphi 0, %s78
      %s81 = sphi 0, %s80
      %s95 = sphi 0, %s81
      %s99 = sphi 0, %s99
      %s101 = sphi 0, %s99
      %s102 = sphi 0, %s101
      %s116 = sphi 0, %s102
      %s120 = sphi 0, %s120
      %s122 = sphi 0, %s120
      %s123 = sphi 0, %s122
      %s137 = sphi 0, %s123
      %s141 = sphi 0, %s141
      %s143 = sphi 0, %s141
      %s144 = sphi 0, %s143
      %s158 = sphi 0, %s144
      %s162 = sphi 0, %s162
      %s164 = sphi 0, %s162
      %s165 = sphi 0, %s164
      %s179 = sphi 0, %s165
      %s183 = sphi 0, %s183
      %s185 = sphi 0, %s183
      %s186 = sphi 0, %s185
      %s200 = sphi 0, %s186
      %s204 = sphi 0, %s204
      %s206 = sphi 0, %s204
      %s207 = sphi 0, %s206
      %s221 = sphi 0, %s207
      %s227 = sphi 0, %s229
      %s230 = sphi 0, %s227
      %s231 = sphi 0, %s230
      %s247 = sphi 0, %s231
    $region4: #{tpu_custom_call.1} parent=1 // loop_header_branch
      %26 = sbr.rel (%p24) target = $region8
    $region5: #{tpu_custom_call.1} parent=1 // loop_body
      %s28 = ssub.s32 %s23, 1
      %s29 = ssub.s32 %s23, 2
      %s30 = sadd.s32 %s23, 1
      %s31 = ssub.s32 %s23, %s30
      %p32 = scmp.eq.s32.totalorder %s31, 0
      %s34 = sadd.s32 %s33, 1
      %s35 = scalar_select %p32, %s33, %s34
      %p38 = pneg %p32
      %p39 = scmp.eq.s32.totalorder %s23, 1
      %p40 = por %p38, %p39
      %p41 = scmp.ne.s32.totalorder %s33, %s36
      %p42 = scmp.eq.s32.totalorder %s23, 0
      %p43 = por %p41, %p42
      %p44 = scmp.ne.s32.totalorder %s33, %s36
      %p45 = scmp.eq.s32.totalorder %s28, 1
      %p46 = por %p44, %p45
      %p47 = scmp.ne.s32.totalorder %s36, %s37
      %p48 = scmp.eq.s32.totalorder %s28, 0
      %p49 = por %p47, %p48
      %p50 = scmp.ne.s32.totalorder %s36, %s37
      %p51 = scmp.eq.s32.totalorder %s29, 1
      %p52 = por %p50, %p51
      %p54 = scmp.ne.s32.totalorder %s37, %s53
      %p55 = scmp.eq.s32.totalorder %s29, 0
      %p56 = por %p54, %p55
      %s58 = sadd.s32 %s57, 1
      %p61 = scmp.eq.s32.totalorder %s23, 1
      %p62 = scmp.ne.s32.totalorder %s57, %s59
      %p63 = scmp.eq.s32.totalorder %s23, 0
      %p64 = por %p62, %p63
      %p65 = scmp.ne.s32.totalorder %s57, %s59
      %p66 = scmp.eq.s32.totalorder %s28, 1
      %p67 = por %p65, %p66
      %p68 = scmp.ne.s32.totalorder %s59, %s60
      %p69 = scmp.eq.s32.totalorder %s28, 0
      %p70 = por %p68, %p69
      %p71 = scmp.ne.s32.totalorder %s59, %s60
      %p72 = scmp.eq.s32.totalorder %s29, 1
      %p73 = por %p71, %p72
      %p75 = scmp.ne.s32.totalorder %s60, %s74
      %p76 = scmp.eq.s32.totalorder %s29, 0
      %p77 = por %p75, %p76
      %s79 = sadd.s32 %s78, 1
      %p82 = scmp.eq.s32.totalorder %s23, 1
      %p83 = scmp.ne.s32.totalorder %s78, %s80
      %p84 = scmp.eq.s32.totalorder %s23, 0
      %p85 = por %p83, %p84
      %p86 = scmp.ne.s32.totalorder %s78, %s80
      %p87 = scmp.eq.s32.totalorder %s28, 1
      %p88 = por %p86, %p87
      %p89 = scmp.ne.s32.totalorder %s80, %s81
      %p90 = scmp.eq.s32.totalorder %s28, 0
      %p91 = por %p89, %p90
      %p92 = scmp.ne.s32.totalorder %s80, %s81
      %p93 = scmp.eq.s32.totalorder %s29, 1
      %p94 = por %p92, %p93
      %p96 = scmp.ne.s32.totalorder %s81, %s95
      %p97 = scmp.eq.s32.totalorder %s29, 0
      %p98 = por %p96, %p97
      %s100 = sadd.s32 %s99, 1
      %p103 = scmp.eq.s32.totalorder %s23, 1
      %p104 = scmp.ne.s32.totalorder %s99, %s101
      %p105 = scmp.eq.s32.totalorder %s23, 0
      %p106 = por %p104, %p105
      %p107 = scmp.ne.s32.totalorder %s99, %s101
      %p108 = scmp.eq.s32.totalorder %s28, 1
      %p109 = por %p107, %p108
      %p110 = scmp.ne.s32.totalorder %s101, %s102
      %p111 = scmp.eq.s32.totalorder %s28, 0
      %p112 = por %p110, %p111
      %p113 = scmp.ne.s32.totalorder %s101, %s102
      %p114 = scmp.eq.s32.totalorder %s29, 1
      %p115 = por %p113, %p114
      %p117 = scmp.ne.s32.totalorder %s102, %s116
      %p118 = scmp.eq.s32.totalorder %s29, 0
      %p119 = por %p117, %p118
      %s121 = sadd.s32 %s120, 1
      %p124 = scmp.eq.s32.totalorder %s23, 1
      %p125 = scmp.ne.s32.totalorder %s120, %s122
      %p126 = scmp.eq.s32.totalorder %s23, 0
      %p127 = por %p125, %p126
      %p128 = scmp.ne.s32.totalorder %s120, %s122
      %p129 = scmp.eq.s32.totalorder %s28, 1
      %p130 = por %p128, %p129
      %p131 = scmp.ne.s32.totalorder %s122, %s123
      %p132 = scmp.eq.s32.totalorder %s28, 0
      %p133 = por %p131, %p132
      %p134 = scmp.ne.s32.totalorder %s122, %s123
      %p135 = scmp.eq.s32.totalorder %s29, 1
      %p136 = por %p134, %p135
      %p138 = scmp.ne.s32.totalorder %s123, %s137
      %p139 = scmp.eq.s32.totalorder %s29, 0
      %p140 = por %p138, %p139
      %s142 = sadd.s32 %s141, 1
      %p145 = scmp.eq.s32.totalorder %s23, 1
      %p146 = scmp.ne.s32.totalorder %s141, %s143
      %p147 = scmp.eq.s32.totalorder %s23, 0
      %p148 = por %p146, %p147
      %p149 = scmp.ne.s32.totalorder %s141, %s143
      %p150 = scmp.eq.s32.totalorder %s28, 1
      %p151 = por %p149, %p150
      %p152 = scmp.ne.s32.totalorder %s143, %s144
      %p153 = scmp.eq.s32.totalorder %s28, 0
      %p154 = por %p152, %p153
      %p155 = scmp.ne.s32.totalorder %s143, %s144
      %p156 = scmp.eq.s32.totalorder %s29, 1
      %p157 = por %p155, %p156
      %p159 = scmp.ne.s32.totalorder %s144, %s158
      %p160 = scmp.eq.s32.totalorder %s29, 0
      %p161 = por %p159, %p160
      %s163 = sadd.s32 %s162, 1
      %p166 = scmp.eq.s32.totalorder %s23, 1
      %p167 = scmp.ne.s32.totalorder %s162, %s164
      %p168 = scmp.eq.s32.totalorder %s23, 0
      %p169 = por %p167, %p168
      %p170 = scmp.ne.s32.totalorder %s162, %s164
      %p171 = scmp.eq.s32.totalorder %s28, 1
      %p172 = por %p170, %p171
      %p173 = scmp.ne.s32.totalorder %s164, %s165
      %p174 = scmp.eq.s32.totalorder %s28, 0
      %p175 = por %p173, %p174
      %p176 = scmp.ne.s32.totalorder %s164, %s165
      %p177 = scmp.eq.s32.totalorder %s29, 1
      %p178 = por %p176, %p177
      %p180 = scmp.ne.s32.totalorder %s165, %s179
      %p181 = scmp.eq.s32.totalorder %s29, 0
      %p182 = por %p180, %p181
      %s184 = sadd.s32 %s183, 1
      %p187 = scmp.eq.s32.totalorder %s23, 1
      %p188 = scmp.ne.s32.totalorder %s183, %s185
      %p189 = scmp.eq.s32.totalorder %s23, 0
      %p190 = por %p188, %p189
      %p191 = scmp.ne.s32.totalorder %s183, %s185
      %p192 = scmp.eq.s32.totalorder %s28, 1
      %p193 = por %p191, %p192
      %p194 = scmp.ne.s32.totalorder %s185, %s186
      %p195 = scmp.eq.s32.totalorder %s28, 0
      %p196 = por %p194, %p195
      %p197 = scmp.ne.s32.totalorder %s185, %s186
      %p198 = scmp.eq.s32.totalorder %s29, 1
      %p199 = por %p197, %p198
      %p201 = scmp.ne.s32.totalorder %s186, %s200
      %p202 = scmp.eq.s32.totalorder %s29, 0
      %p203 = por %p201, %p202
      %s205 = sadd.s32 %s204, 1
      %p208 = scmp.eq.s32.totalorder %s23, 1
      %p209 = scmp.ne.s32.totalorder %s204, %s206
      %p210 = scmp.eq.s32.totalorder %s23, 0
      %p211 = por %p209, %p210
      %p212 = scmp.ne.s32.totalorder %s204, %s206
      %p213 = scmp.eq.s32.totalorder %s28, 1
      %p214 = por %p212, %p213
      %p215 = scmp.ne.s32.totalorder %s206, %s207
      %p216 = scmp.eq.s32.totalorder %s28, 0
      %p217 = por %p215, %p216
      %p218 = scmp.ne.s32.totalorder %s206, %s207
      %p219 = scmp.eq.s32.totalorder %s29, 1
      %p220 = por %p218, %p219
      %p222 = scmp.ne.s32.totalorder %s207, %s221
      %p223 = scmp.eq.s32.totalorder %s29, 0
      %p224 = por %p222, %p223
      %s225 = ssub.s32 %s23, %s30
      %p226 = scmp.eq.s32.totalorder %s225, 0
      %s228 = sadd.s32 %s227, 1
      %s229 = scalar_select %p226, %s227, %s228
      %p232 = pneg %p226
      %p233 = scmp.eq.s32.totalorder %s23, 1
      %p234 = por %p232, %p233
      %p235 = scmp.ne.s32.totalorder %s227, %s230
      %p236 = scmp.eq.s32.totalorder %s23, 0
      %p237 = por %p235, %p236
      %p238 = scmp.ne.s32.totalorder %s227, %s230
      %p239 = scmp.eq.s32.totalorder %s28, 1
      %p240 = por %p238, %p239
      %p241 = scmp.ne.s32.totalorder %s230, %s231
      %p242 = scmp.eq.s32.totalorder %s28, 0
      %p243 = por %p241, %p242
      %p244 = scmp.ne.s32.totalorder %s230, %s231
      %p245 = scmp.eq.s32.totalorder %s29, 1
      %p246 = por %p244, %p245
      %p248 = scmp.ne.s32.totalorder %s231, %s247
      %p249 = scmp.eq.s32.totalorder %s29, 0
      %p250 = por %p248, %p249
      %p251 = scmp.le.s32.totalorder 1, %s23
      %p252 = scmp.lt.s32.totalorder %s23, 3
      %p253 = pnand %p251, %p252
      %p254 = pneg %p253
      // Predicated region
      $region9: #{tpu_custom_call.1} parent=5 // pred_check
        _
      $region10: #{tpu_custom_call.1} parent=5 // pred_check_branch
        %256 = sbr.rel (%p253) target = $region12
      $region11: #{tpu_custom_call.1} parent=5 // pred_region
        %s257 = ssub.s32 %s23, 1
        // Predicated region
        $region13: #{tpu_custom_call.1} parent=11 // pred_check
          %p258 = pneg %p70
        $region14: #{tpu_custom_call.1} parent=11 // pred_check_branch
          %260 = sbr.rel (%p258) target = $region16
        $region15: #{tpu_custom_call.1} parent=11 // pred_region
          %s262 = ssub.s32 1024, 1024
          %263 = vsyncadd [#allocation6], %s262
          %s264 = sshll.u32 [#allocation5], 4
          %s265 = int_to_ptr.vmem [resolvable:$true] %s264
          %270 = dma.hbm_to_vmem [thread:$0]  %s1, 1024, %s265, [#allocation6], 64, 64, 4
        $region16: #{tpu_custom_call.1} parent=11 // pred_fallthru
          _
        // Predicated region
        $region17: #{tpu_custom_call.1} parent=11 // pred_check
          %p271 = pneg %p91
        $region18: #{tpu_custom_call.1} parent=11 // pred_check_branch
          %273 = sbr.rel (%p271) target = $region20
        $region19: #{tpu_custom_call.1} parent=11 // pred_region
          _
        $region20: #{tpu_custom_call.1} parent=11 // pred_fallthru
          _
        // Predicated region
        $region21: #{tpu_custom_call.1} parent=11 // pred_check
          %p274 = pneg %p112
        $region22: #{tpu_custom_call.1} parent=11 // pred_check_branch
          %276 = sbr.rel (%p274) target = $region24
        $region23: #{tpu_custom_call.1} parent=11 // pred_region
          %s278 = ssub.s32 1024, 1024
          %279 = vsyncadd [#allocation6], %s278
          %s280 = sshll.u32 [#allocation7], 4
          %s281 = int_to_ptr.vmem [resolvable:$true] %s280
          %286 = dma.hbm_to_vmem [thread:$0]  %s3, 1024, %s281, [#allocation6], 64, 64, 4
        $region24: #{tpu_custom_call.1} parent=11 // pred_fallthru
          _
        // Predicated region
        $region25: #{tpu_custom_call.1} parent=11 // pred_check
          %p287 = pneg %p133
        $region26: #{tpu_custom_call.1} parent=11 // pred_check_branch
          %289 = sbr.rel (%p287) target = $region28
        $region27: #{tpu_custom_call.1} parent=11 // pred_region
          _
        $region28: #{tpu_custom_call.1} parent=11 // pred_fallthru
          _
        // Predicated region
        $region29: #{tpu_custom_call.1} parent=11 // pred_check
          %p290 = pneg %p154
        $region30: #{tpu_custom_call.1} parent=11 // pred_check_branch
          %292 = sbr.rel (%p290) target = $region32
        $region31: #{tpu_custom_call.1} parent=11 // pred_region
          %s294 = ssub.s32 1024, 1024
          %295 = vsyncadd [#allocation9], %s294
          %s296 = sshll.u32 [#allocation8], 4
          %s297 = int_to_ptr.vmem [resolvable:$true] %s296
          %302 = dma.hbm_to_vmem [thread:$0]  %s5, 1024, %s297, [#allocation9], 64, 64, 4
        $region32: #{tpu_custom_call.1} parent=11 // pred_fallthru
          _
        // Predicated region
        $region33: #{tpu_custom_call.1} parent=11 // pred_check
          %p303 = pneg %p175
        $region34: #{tpu_custom_call.1} parent=11 // pred_check_branch
          %305 = sbr.rel (%p303) target = $region36
        $region35: #{tpu_custom_call.1} parent=11 // pred_region
          _
        $region36: #{tpu_custom_call.1} parent=11 // pred_fallthru
          _
        // Predicated region
        $region37: #{tpu_custom_call.1} parent=11 // pred_check
          %p306 = pneg %p196
        $region38: #{tpu_custom_call.1} parent=11 // pred_check_branch
          %308 = sbr.rel (%p306) target = $region40
        $region39: #{tpu_custom_call.1} parent=11 // pred_region
          %s310 = ssub.s32 1024, 1024
          %311 = vsyncadd [#allocation9], %s310
          %s312 = sshll.u32 [#allocation10], 4
          %s313 = int_to_ptr.vmem [resolvable:$true] %s312
          %318 = dma.hbm_to_vmem [thread:$0]  %s7, 1024, %s313, [#allocation9], 64, 64, 4
        $region40: #{tpu_custom_call.1} parent=11 // pred_fallthru
          _
        // Predicated region
        $region41: #{tpu_custom_call.1} parent=11 // pred_check
          %p319 = pneg %p217
        $region42: #{tpu_custom_call.1} parent=11 // pred_check_branch
          %321 = sbr.rel (%p319) target = $region44
        $region43: #{tpu_custom_call.1} parent=11 // pred_region
          _
        $region44: #{tpu_custom_call.1} parent=11 // pred_fallthru
          _
      $region12: #{tpu_custom_call.1} parent=5 // pred_fallthru
        _
      %p322 = scmp.lt.s32.totalorder %s23, 2
      // Predicated region
      $region45: #{tpu_custom_call.1} parent=5 // pred_check
        %p323 = pneg %p322
      $region46: #{tpu_custom_call.1} parent=5 // pred_check_branch
        %325 = sbr.rel (%p323) target = $region48
      $region47: #{tpu_custom_call.1} parent=5 // pred_region
        // Predicated region
        $region49: #{tpu_custom_call.1} parent=47 // pred_check
          %p326 = pneg %p43
        $region50: #{tpu_custom_call.1} parent=47 // pred_check_branch
          %328 = sbr.rel (%p326) target = $region52
        $region51: #{tpu_custom_call.1} parent=47 // pred_region
          %s329 = sand.u32 %s33, 1
          %s330 = scalar_lea.sflag [#allocation3], %s329
          %s331 = sand.u32 %s33, 1
          %s332 = smul.addr %s331, 4
          %s333 = scalar_lea.vmem [#allocation2], %s332
          %s335 = ssub.s32 64, 64
          %336 = vsyncadd %s330, %s335
          %s337 = smul.addr %s23, 64
          %s338 = scalar_lea.hbm %s0, %s337
          %s340 = sshll.u32 %s333, 4
          %s341 = int_to_ptr.vmem [resolvable:$true] %s340
          %343 = dma.hbm_to_vmem [thread:$0]  %s338, 64, %s341, %s330
        $region52: #{tpu_custom_call.1} parent=47 // pred_fallthru
          _
      $region48: #{tpu_custom_call.1} parent=5 // pred_fallthru
        _
      %p344 = scmp.le.s32.totalorder 1, %s23
      %p345 = scmp.lt.s32.totalorder %s23, 3
      %p346 = pnand %p344, %p345
      %p347 = pneg %p346
      // Predicated region
      $region53: #{tpu_custom_call.1} parent=5 // pred_check
        _
      $region54: #{tpu_custom_call.1} parent=5 // pred_check_branch
        %349 = sbr.rel (%p346) target = $region56
      $region55: #{tpu_custom_call.1} parent=5 // pred_region
        %s350 = ssub.s32 %s23, 1
        %s351 = sand.u32 %s36, 1
        %s352 = scalar_lea.sflag [#allocation3], %s351
        %s353 = sand.u32 %s36, 1
        %s354 = smul.addr %s353, 4
        %s355 = scalar_lea.vmem [#allocation2], %s354
        // Predicated region
        $region57: #{tpu_custom_call.1} parent=55 // pred_check
          %p356 = pneg %p49
        $region58: #{tpu_custom_call.1} parent=55 // pred_check_branch
          %358 = sbr.rel (%p356) target = $region60
        $region59: #{tpu_custom_call.1} parent=55 // pred_region
          %359 = dma.done %s352, 64
        $region60: #{tpu_custom_call.1} parent=55 // pred_fallthru
          _
        // Predicated region
        $region61: #{tpu_custom_call.1} parent=55 // pred_check
          %p360 = pneg %p70
        $region62: #{tpu_custom_call.1} parent=55 // pred_check_branch
          %362 = sbr.rel (%p360) target = $region64
        $region63: #{tpu_custom_call.1} parent=55 // pred_region
          %363 = dma.done [#allocation6], 1024
        $region64: #{tpu_custom_call.1} parent=55 // pred_fallthru
          _
        // Predicated region
        $region65: #{tpu_custom_call.1} parent=55 // pred_check
          %p364 = pneg %p112
        $region66: #{tpu_custom_call.1} parent=55 // pred_check_branch
          %366 = sbr.rel (%p364) target = $region68
        $region67: #{tpu_custom_call.1} parent=55 // pred_region
          %367 = dma.done [#allocation6], 1024
        $region68: #{tpu_custom_call.1} parent=55 // pred_fallthru
          _
        // Predicated region
        $region69: #{tpu_custom_call.1} parent=55 // pred_check
          %p368 = pneg %p154
        $region70: #{tpu_custom_call.1} parent=55 // pred_check_branch
          %370 = sbr.rel (%p368) target = $region72
        $region71: #{tpu_custom_call.1} parent=55 // pred_region
          %371 = dma.done [#allocation9], 1024
        $region72: #{tpu_custom_call.1} parent=55 // pred_fallthru
          _
        // Predicated region
        $region73: #{tpu_custom_call.1} parent=55 // pred_check
          %p372 = pneg %p196
        $region74: #{tpu_custom_call.1} parent=55 // pred_check_branch
          %374 = sbr.rel (%p372) target = $region76
        $region75: #{tpu_custom_call.1} parent=55 // pred_region
          %375 = dma.done [#allocation9], 1024
        $region76: #{tpu_custom_call.1} parent=55 // pred_fallthru
          _
        %s376 = sand.u32 %s36, 1
        %s377 = scalar_lea.sflag [#allocation3], %s376
        %s378 = sand.u32 %s36, 1
        %s379 = smul.addr %s378, 4
        %s380 = scalar_lea.vmem [#allocation2], %s379
        %p381 = pneg %p49
        %p382 = pneg %p46
        %p383 = pneg %p70
        %p384 = pneg %p67
        %p385 = pneg %p91
        %p386 = pneg %p88
        %p387 = pneg %p112
        %p388 = pneg %p109
        %p389 = pneg %p133
        %p390 = pneg %p130
        %p391 = pneg %p154
        %p392 = pneg %p151
        %p393 = pneg %p175
        %p394 = pneg %p172
        %p395 = pneg %p196
        %p396 = pneg %p193
        %p397 = pneg %p217
        %p398 = pneg %p214
        %p399 = pneg %p243
        %p400 = pneg %p240
        %s401 = sand.u32 %s230, 1
        %s402 = scalar_lea.sflag [#allocation4], %s401
        %s403 = sand.u32 %s230, 1
        %s404 = smul.addr %s403, 8
        %s405 = scalar_lea.vmem [#allocation11], %s404
        %v407 = vld [vmem:[%s355] sm:$0xf]
        %v408 = vld [vmem:[#allocation7] sm:$0xf]
        %v409 = vld [vmem:[#allocation7 + $0x4] sm:$0xf]
        %v410 = vld [vmem:[#allocation7 + $0x8] sm:$0xf]
        %v411 = vld [vmem:[#allocation7 + $0xc] sm:$0xf]
        %v412 = vld [vmem:[#allocation7 + $0x10] sm:$0xf]
        %v413 = vld [vmem:[#allocation7 + $0x14] sm:$0xf]
        %v414 = vld [vmem:[#allocation7 + $0x18] sm:$0xf]
        %v415 = vld [vmem:[#allocation7 + $0x1c] sm:$0xf]
        %v416 = vld [vmem:[#allocation7 + $0x20] sm:$0xf]
        %v417 = vld [vmem:[#allocation7 + $0x24] sm:$0xf]
        %v418 = vld [vmem:[#allocation7 + $0x28] sm:$0xf]
        %v419 = vld [vmem:[#allocation7 + $0x2c] sm:$0xf]
        %v420 = vld [vmem:[#allocation7 + $0x30] sm:$0xf]
        %v421 = vld [vmem:[#allocation7 + $0x34] sm:$0xf]
        %v422 = vld [vmem:[#allocation7 + $0x38] sm:$0xf]
        %v423 = vld [vmem:[#allocation7 + $0x3c] sm:$0xf]
        %v424 = vld [vmem:[#allocation8] sm:$0xf]
        %v425 = vld [vmem:[#allocation8 + $0x4] sm:$0xf]
        %v426 = vld [vmem:[#allocation8 + $0x8] sm:$0xf]
        %v427 = vld [vmem:[#allocation8 + $0xc] sm:$0xf]
        %v428 = vld [vmem:[#allocation8 + $0x10] sm:$0xf]
        %v429 = vld [vmem:[#allocation8 + $0x14] sm:$0xf]
        %v430 = vld [vmem:[#allocation8 + $0x18] sm:$0xf]
        %v431 = vld [vmem:[#allocation8 + $0x1c] sm:$0xf]
        %v432 = vld [vmem:[#allocation8 + $0x20] sm:$0xf]
        %v433 = vld [vmem:[#allocation8 + $0x24] sm:$0xf]
        %v434 = vld [vmem:[#allocation8 + $0x28] sm:$0xf]
        %v435 = vld [vmem:[#allocation8 + $0x2c] sm:$0xf]
        %v436 = vld [vmem:[#allocation8 + $0x30] sm:$0xf]
        %v437 = vld [vmem:[#allocation8 + $0x34] sm:$0xf]
        %v438 = vld [vmem:[#allocation8 + $0x38] sm:$0xf]
        %v439 = vld [vmem:[#allocation8 + $0x3c] sm:$0xf]
        %v440 = vld [vmem:[#allocation5] sm:$0xf]
        %v441 = vld [vmem:[#allocation5 + $0x4] sm:$0xf]
        %v442 = vld [vmem:[#allocation5 + $0x8] sm:$0xf]
        %v443 = vld [vmem:[#allocation5 + $0xc] sm:$0xf]
        %v444 = vld [vmem:[#allocation5 + $0x10] sm:$0xf]
        %v445 = vld [vmem:[#allocation5 + $0x14] sm:$0xf]
        %v446 = vld [vmem:[#allocation5 + $0x18] sm:$0xf]
        %v447 = vld [vmem:[#allocation5 + $0x1c] sm:$0xf]
        %v448 = vld [vmem:[#allocation5 + $0x20] sm:$0xf]
        %v449 = vld [vmem:[#allocation5 + $0x24] sm:$0xf]
        %v450 = vld [vmem:[#allocation5 + $0x28] sm:$0xf]
        %v451 = vld [vmem:[#allocation5 + $0x2c] sm:$0xf]
        %v452 = vld [vmem:[#allocation5 + $0x30] sm:$0xf]
        %v453 = vld [vmem:[#allocation5 + $0x34] sm:$0xf]
        %v454 = vld [vmem:[#allocation5 + $0x38] sm:$0xf]
        %v455 = vld [vmem:[#allocation5 + $0x3c] sm:$0xf]
        %v456 = vld [vmem:[%s2] sm:$0x1]
        %v458 = vlaneseq
        %v459 = vshrl.u32 %v458, 7
        %v460 = vsub.s32 0, %v459
        %v461 = vrot.slane %v456, %v460
        %v479 = vunpack.c.l.b16 %v440
        %v480 = vunpack.c.l.b16 %v441
        %v481 = vunpack.c.l.b16 %v442
        %v482 = vunpack.c.l.b16 %v443
        %v483 = vunpack.c.l.b16 %v444
        %v484 = vunpack.c.l.b16 %v445
        %v485 = vunpack.c.l.b16 %v446
        %v486 = vunpack.c.l.b16 %v447
        %v487 = vunpack.c.l.b16 %v448
        %v488 = vunpack.c.l.b16 %v449
        %v489 = vunpack.c.l.b16 %v450
        %v490 = vunpack.c.l.b16 %v451
        %v491 = vunpack.c.l.b16 %v452
        %v492 = vunpack.c.l.b16 %v453
        %v493 = vunpack.c.l.b16 %v454
        %v494 = vunpack.c.l.b16 %v455
        %v495 = vpack.c.b16 %v480, %v479
        %v496 = vpack.c.b16 %v482, %v481
        %v497 = vpack.c.b16 %v484, %v483
        %v498 = vpack.c.b16 %v486, %v485
        %v499 = vpack.c.b16 %v488, %v487
        %v500 = vpack.c.b16 %v490, %v489
        %v501 = vpack.c.b16 %v492, %v491
        %v502 = vpack.c.b16 %v494, %v493
        %511 = vmatprep.subr.bf16.mxu0 0
        %512 = vmatpush1.bf16.msra.mxu0 %v495
        %513 = vmatprep.subr.bf16.mxu0 0
        %514 = vmatpush1.bf16.msra.mxu0 %v496
        %515 = vmatprep.subr.bf16.mxu0 0
        %516 = vmatpush1.bf16.msra.mxu0 %v497
        %517 = vmatprep.subr.bf16.mxu0 0
        %518 = vmatpush1.bf16.msra.mxu0 %v498
        %519 = vmatprep.subr.bf16.mxu0 0
        %520 = vmatpush1.bf16.msra.mxu0 %v499
        %521 = vmatprep.subr.bf16.mxu0 0
        %522 = vmatpush1.bf16.msra.mxu0 %v500
        %523 = vmatprep.subr.bf16.mxu0 0
        %524 = vmatpush1.bf16.msra.mxu0 %v501
        %525 = vmatprep.subr.bf16.mxu0 0
        %526 = vmatpush1.bf16.msra.mxu0 %v502
        %527 = vmatprep.subr.bf16.mxu0 0
        %528 = vmatpush1.bf16.msra.mxu0 0
        %529 = vmatprep.subr.bf16.mxu0 0
        %530 = vmatpush1.bf16.msra.mxu0 0
        %531 = vmatprep.subr.bf16.mxu0 0
        %532 = vmatpush1.bf16.msra.mxu0 0
        %533 = vmatprep.subr.bf16.mxu0 0
        %534 = vmatpush1.bf16.msra.mxu0 0
        %535 = vmatprep.subr.bf16.mxu0 0
        %536 = vmatpush1.bf16.msra.mxu0 0
        %537 = vmatprep.subr.bf16.mxu0 0
        %538 = vmatpush1.bf16.msra.mxu0 0
        %539 = vmatprep.subr.bf16.mxu0 0
        %540 = vmatpush1.bf16.msra.mxu0 0
        %541 = vmatprep.subr.bf16.mxu0 0
        %542 = vmatpush1.bf16.msra.mxu0 0
        %543 = vmatprep.mubr.bf16.mxu0 0
        %544 = vmatmul.mubr.bf16.gmra.mrb[0].mxu0 %v407
        %v545 = vpop.f32.mrb[0].mxu0
        %v546 = vadd.f32 %v461, %v545
        %v547 = vpop.f32.mrb[0].mxu0
        %v548 = vpop.f32.mrb[0].mxu0
        %v549 = vpop.f32.mrb[0].mxu0
        %550 = vdwg.mxu0
        %v551 = vld [vmem:[%s4] sm:$0x1]
        %v553 = vlaneseq
        %v554 = vshrl.u32 %v553, 7
        %v555 = vsub.s32 0, %v554
        %v556 = vrot.slane %v551, %v555
        %v558 = vld [vmem:[%s6] sm:$0x1]
        %v560 = vlaneseq
        %v561 = vshrl.u32 %v560, 7
        %v562 = vsub.s32 0, %v561
        %v563 = vrot.slane %v558, %v562
        %v565 = vpack.c.bf16 %v546, %v546
        %v582 = vunpack.c.l.b16 %v408
        %v583 = vunpack.c.l.b16 %v409
        %v584 = vunpack.c.l.b16 %v410
        %v585 = vunpack.c.l.b16 %v411
        %v586 = vunpack.c.l.b16 %v412
        %v587 = vunpack.c.l.b16 %v413
        %v588 = vunpack.c.l.b16 %v414
        %v589 = vunpack.c.l.b16 %v415
        %v590 = vunpack.c.l.b16 %v416
        %v591 = vunpack.c.l.b16 %v417
        %v592 = vunpack.c.l.b16 %v418
        %v593 = vunpack.c.l.b16 %v419
        %v594 = vunpack.c.l.b16 %v420
        %v595 = vunpack.c.l.b16 %v421
        %v596 = vunpack.c.l.b16 %v422
        %v597 = vunpack.c.l.b16 %v423
        %v598 = vpack.c.b16 %v583, %v582
        %v599 = vpack.c.b16 %v585, %v584
        %v600 = vpack.c.b16 %v587, %v586
        %v601 = vpack.c.b16 %v589, %v588
        %v602 = vpack.c.b16 %v591, %v590
        %v603 = vpack.c.b16 %v593, %v592
        %v604 = vpack.c.b16 %v595, %v594
        %v605 = vpack.c.b16 %v597, %v596
        %614 = vmatprep.subr.bf16.mxu0 0
        %615 = vmatpush1.bf16.msra.mxu0 %v598
        %616 = vmatprep.subr.bf16.mxu0 0
        %617 = vmatpush1.bf16.msra.mxu0 %v599
        %618 = vmatprep.subr.bf16.mxu0 0
        %619 = vmatpush1.bf16.msra.mxu0 %v600
        %620 = vmatprep.subr.bf16.mxu0 0
        %621 = vmatpush1.bf16.msra.mxu0 %v601
        %622 = vmatprep.subr.bf16.mxu0 0
        %623 = vmatpush1.bf16.msra.mxu0 %v602
        %624 = vmatprep.subr.bf16.mxu0 0
        %625 = vmatpush1.bf16.msra.mxu0 %v603
        %626 = vmatprep.subr.bf16.mxu0 0
        %627 = vmatpush1.bf16.msra.mxu0 %v604
        %628 = vmatprep.subr.bf16.mxu0 0
        %629 = vmatpush1.bf16.msra.mxu0 %v605
        %630 = vmatprep.subr.bf16.mxu0 0
        %631 = vmatpush1.bf16.msra.mxu0 0
        %632 = vmatprep.subr.bf16.mxu0 0
        %633 = vmatpush1.bf16.msra.mxu0 0
        %634 = vmatprep.subr.bf16.mxu0 0
        %635 = vmatpush1.bf16.msra.mxu0 0
        %636 = vmatprep.subr.bf16.mxu0 0
        %637 = vmatpush1.bf16.msra.mxu0 0
        %638 = vmatprep.subr.bf16.mxu0 0
        %639 = vmatpush1.bf16.msra.mxu0 0
        %640 = vmatprep.subr.bf16.mxu0 0
        %641 = vmatpush1.bf16.msra.mxu0 0
        %642 = vmatprep.subr.bf16.mxu0 0
        %643 = vmatpush1.bf16.msra.mxu0 0
        %644 = vmatprep.subr.bf16.mxu0 0
        %645 = vmatpush1.bf16.msra.mxu0 0
        %646 = vmatprep.mubr.bf16.mxu0 0
        %647 = vmatmul.mubr.bf16.gmra.mrb[0].mxu0 %v565
        %v648 = vpop.f32.mrb[0].mxu0
        %v649 = vadd.f32 %v556, %v648
        %v650 = vpop.f32.mrb[0].mxu0
        %v651 = vpop.f32.mrb[0].mxu0
        %v652 = vpop.f32.mrb[0].mxu0
        %653 = vdwg.mxu0
        %v654 = vadd.f32 %v546, %v649
        %v655 = vmax.f32 %v654, 0.0
        %v656 = vpack.c.bf16 %v655, %v655
        %v673 = vunpack.c.l.b16 %v424
        %v674 = vunpack.c.l.b16 %v425
        %v675 = vunpack.c.l.b16 %v426
        %v676 = vunpack.c.l.b16 %v427
        %v677 = vunpack.c.l.b16 %v428
        %v678 = vunpack.c.l.b16 %v429
        %v679 = vunpack.c.l.b16 %v430
        %v680 = vunpack.c.l.b16 %v431
        %v681 = vunpack.c.l.b16 %v432
        %v682 = vunpack.c.l.b16 %v433
        %v683 = vunpack.c.l.b16 %v434
        %v684 = vunpack.c.l.b16 %v435
        %v685 = vunpack.c.l.b16 %v436
        %v686 = vunpack.c.l.b16 %v437
        %v687 = vunpack.c.l.b16 %v438
        %v688 = vunpack.c.l.b16 %v439
        %v689 = vpack.c.b16 %v674, %v673
        %v690 = vpack.c.b16 %v676, %v675
        %v691 = vpack.c.b16 %v678, %v677
        %v692 = vpack.c.b16 %v680, %v679
        %v693 = vpack.c.b16 %v682, %v681
        %v694 = vpack.c.b16 %v684, %v683
        %v695 = vpack.c.b16 %v686, %v685
        %v696 = vpack.c.b16 %v688, %v687
        %705 = vmatprep.subr.bf16.mxu0 0
        %706 = vmatpush1.bf16.msra.mxu0 %v689
        %707 = vmatprep.subr.bf16.mxu0 0
        %708 = vmatpush1.bf16.msra.mxu0 %v690
        %709 = vmatprep.subr.bf16.mxu0 0
        %710 = vmatpush1.bf16.msra.mxu0 %v691
        %711 = vmatprep.subr.bf16.mxu0 0
        %712 = vmatpush1.bf16.msra.mxu0 %v692
        %713 = vmatprep.subr.bf16.mxu0 0
        %714 = vmatpush1.bf16.msra.mxu0 %v693
        %715 = vmatprep.subr.bf16.mxu0 0
        %716 = vmatpush1.bf16.msra.mxu0 %v694
        %717 = vmatprep.subr.bf16.mxu0 0
        %718 = vmatpush1.bf16.msra.mxu0 %v695
        %719 = vmatprep.subr.bf16.mxu0 0
        %720 = vmatpush1.bf16.msra.mxu0 %v696
        %721 = vmatprep.subr.bf16.mxu0 0
        %722 = vmatpush1.bf16.msra.mxu0 0
        %723 = vmatprep.subr.bf16.mxu0 0
        %724 = vmatpush1.bf16.msra.mxu0 0
        %725 = vmatprep.subr.bf16.mxu0 0
        %726 = vmatpush1.bf16.msra.mxu0 0
        %727 = vmatprep.subr.bf16.mxu0 0
        %728 = vmatpush1.bf16.msra.mxu0 0
        %729 = vmatprep.subr.bf16.mxu0 0
        %730 = vmatpush1.bf16.msra.mxu0 0
        %731 = vmatprep.subr.bf16.mxu0 0
        %732 = vmatpush1.bf16.msra.mxu0 0
        %733 = vmatprep.subr.bf16.mxu0 0
        %734 = vmatpush1.bf16.msra.mxu0 0
        %735 = vmatprep.subr.bf16.mxu0 0
        %736 = vmatpush1.bf16.msra.mxu0 0
        %737 = vmatprep.mubr.bf16.mxu0 0
        %738 = vmatmul.mubr.bf16.gmra.mrb[0].mxu0 %v656
        %v739 = vpop.f32.mrb[0].mxu0
        %v740 = vadd.f32 %v563, %v739
        %v741 = vpop.f32.mrb[0].mxu0
        %v742 = vpop.f32.mrb[0].mxu0
        %v743 = vpop.f32.mrb[0].mxu0
        %744 = vdwg.mxu0
        %v745 = vadd.f32 %v655, %v740
        %v746 = vmax.f32 %v745, 0.0
        %v747 = vpack.c.bf16 %v746, %v746
        %748 = vmatprep.subr.bf16.mxu0 0
        %749 = vmatpush1.bf16.msra.mxu0 %v598
        %750 = vmatprep.subr.bf16.mxu0 0
        %751 = vmatpush1.bf16.msra.mxu0 %v599
        %752 = vmatprep.subr.bf16.mxu0 0
        %753 = vmatpush1.bf16.msra.mxu0 %v600
        %754 = vmatprep.subr.bf16.mxu0 0
        %755 = vmatpush1.bf16.msra.mxu0 %v601
        %756 = vmatprep.subr.bf16.mxu0 0
        %757 = vmatpush1.bf16.msra.mxu0 %v602
        %758 = vmatprep.subr.bf16.mxu0 0
        %759 = vmatpush1.bf16.msra.mxu0 %v603
        %760 = vmatprep.subr.bf16.mxu0 0
        %761 = vmatpush1.bf16.msra.mxu0 %v604
        %762 = vmatprep.subr.bf16.mxu0 0
        %763 = vmatpush1.bf16.msra.mxu0 %v605
        %764 = vmatprep.subr.bf16.mxu0 0
        %765 = vmatpush1.bf16.msra.mxu0 0
        %766 = vmatprep.subr.bf16.mxu0 0
        %767 = vmatpush1.bf16.msra.mxu0 0
        %768 = vmatprep.subr.bf16.mxu0 0
        %769 = vmatpush1.bf16.msra.mxu0 0
        %770 = vmatprep.subr.bf16.mxu0 0
        %771 = vmatpush1.bf16.msra.mxu0 0
        %772 = vmatprep.subr.bf16.mxu0 0
        %773 = vmatpush1.bf16.msra.mxu0 0
        %774 = vmatprep.subr.bf16.mxu0 0
        %775 = vmatpush1.bf16.msra.mxu0 0
        %776 = vmatprep.subr.bf16.mxu0 0
        %777 = vmatpush1.bf16.msra.mxu0 0
        %778 = vmatprep.subr.bf16.mxu0 0
        %779 = vmatpush1.bf16.msra.mxu0 0
        %780 = vmatprep.mubr.bf16.mxu0 0
        %781 = vmatmul.mubr.bf16.gmra.mrb[0].mxu0 %v747
        %v782 = vpop.f32.mrb[0].mxu0
        %v783 = vadd.f32 %v556, %v782
        %v784 = vpop.f32.mrb[0].mxu0
        %v785 = vpop.f32.mrb[0].mxu0
        %v786 = vpop.f32.mrb[0].mxu0
        %787 = vdwg.mxu0
        %v788 = vadd.f32 %v746, %v783
        %v789 = vmax.f32 %v788, 0.0
        %v790 = vpack.c.bf16 %v789, %v789
        %791 = vmatprep.subr.bf16.mxu0 0
        %792 = vmatpush1.bf16.msra.mxu0 %v689
        %793 = vmatprep.subr.bf16.mxu0 0
        %794 = vmatpush1.bf16.msra.mxu0 %v690
        %795 = vmatprep.subr.bf16.mxu0 0
        %796 = vmatpush1.bf16.msra.mxu0 %v691
        %797 = vmatprep.subr.bf16.mxu0 0
        %798 = vmatpush1.bf16.msra.mxu0 %v692
        %799 = vmatprep.subr.bf16.mxu0 0
        %800 = vmatpush1.bf16.msra.mxu0 %v693
        %801 = vmatprep.subr.bf16.mxu0 0
        %802 = vmatpush1.bf16.msra.mxu0 %v694
        %803 = vmatprep.subr.bf16.mxu0 0
        %804 = vmatpush1.bf16.msra.mxu0 %v695
        %805 = vmatprep.subr.bf16.mxu0 0
        %806 = vmatpush1.bf16.msra.mxu0 %v696
        %807 = vmatprep.subr.bf16.mxu0 0
        %808 = vmatpush1.bf16.msra.mxu0 0
        %809 = vmatprep.subr.bf16.mxu0 0
        %810 = vmatpush1.bf16.msra.mxu0 0
        %811 = vmatprep.subr.bf16.mxu0 0
        %812 = vmatpush1.bf16.msra.mxu0 0
        %813 = vmatprep.subr.bf16.mxu0 0
        %814 = vmatpush1.bf16.msra.mxu0 0
        %815 = vmatprep.subr.bf16.mxu0 0
        %816 = vmatpush1.bf16.msra.mxu0 0
        %817 = vmatprep.subr.bf16.mxu0 0
        %818 = vmatpush1.bf16.msra.mxu0 0
        %819 = vmatprep.subr.bf16.mxu0 0
        %820 = vmatpush1.bf16.msra.mxu0 0
        %821 = vmatprep.subr.bf16.mxu0 0
        %822 = vmatpush1.bf16.msra.mxu0 0
        %823 = vmatprep.mubr.bf16.mxu0 0
        %824 = vmatmul.mubr.bf16.gmra.mrb[0].mxu0 %v790
        %v825 = vpop.f32.mrb[0].mxu0
        %v826 = vadd.f32 %v563, %v825
        %v827 = vpop.f32.mrb[0].mxu0
        %v828 = vpop.f32.mrb[0].mxu0
        %v829 = vpop.f32.mrb[0].mxu0
        %830 = vdwg.mxu0
        %v831 = vadd.f32 %v789, %v826
        %v832 = vmax.f32 %v831, 0.0
        %v833 = vpack.c.bf16 %v832, %v832
        %v834 = vld [vmem:[#allocation10] sm:$0xf]
        %v835 = vld [vmem:[#allocation10 + $0x4] sm:$0xf]
        %v836 = vld [vmem:[#allocation10 + $0x8] sm:$0xf]
        %v837 = vld [vmem:[#allocation10 + $0xc] sm:$0xf]
        %v838 = vld [vmem:[#allocation10 + $0x10] sm:$0xf]
        %v839 = vld [vmem:[#allocation10 + $0x14] sm:$0xf]
        %v840 = vld [vmem:[#allocation10 + $0x18] sm:$0xf]
        %v841 = vld [vmem:[#allocation10 + $0x1c] sm:$0xf]
        %v842 = vld [vmem:[#allocation10 + $0x20] sm:$0xf]
        %v843 = vld [vmem:[#allocation10 + $0x24] sm:$0xf]
        %v844 = vld [vmem:[#allocation10 + $0x28] sm:$0xf]
        %v845 = vld [vmem:[#allocation10 + $0x2c] sm:$0xf]
        %v846 = vld [vmem:[#allocation10 + $0x30] sm:$0xf]
        %v847 = vld [vmem:[#allocation10 + $0x34] sm:$0xf]
        %v848 = vld [vmem:[#allocation10 + $0x38] sm:$0xf]
        %v849 = vld [vmem:[#allocation10 + $0x3c] sm:$0xf]
        %v850 = vld [vmem:[%s8] sm:$0x1]
        %v852 = vlaneseq
        %v853 = vshrl.u32 %v852, 7
        %v854 = vsub.s32 0, %v853
        %v855 = vrot.slane %v850, %v854
        %v873 = vunpack.c.l.b16 %v834
        %v874 = vunpack.c.l.b16 %v835
        %v875 = vunpack.c.l.b16 %v836
        %v876 = vunpack.c.l.b16 %v837
        %v877 = vunpack.c.l.b16 %v838
        %v878 = vunpack.c.l.b16 %v839
        %v879 = vunpack.c.l.b16 %v840
        %v880 = vunpack.c.l.b16 %v841
        %v881 = vunpack.c.l.b16 %v842
        %v882 = vunpack.c.l.b16 %v843
        %v883 = vunpack.c.l.b16 %v844
        %v884 = vunpack.c.l.b16 %v845
        %v885 = vunpack.c.l.b16 %v846
        %v886 = vunpack.c.l.b16 %v847
        %v887 = vunpack.c.l.b16 %v848
        %v888 = vunpack.c.l.b16 %v849
        %v889 = vpack.c.b16 %v874, %v873
        %v890 = vpack.c.b16 %v876, %v875
        %v891 = vpack.c.b16 %v878, %v877
        %v892 = vpack.c.b16 %v880, %v879
        %v893 = vpack.c.b16 %v882, %v881
        %v894 = vpack.c.b16 %v884, %v883
        %v895 = vpack.c.b16 %v886, %v885
        %v896 = vpack.c.b16 %v888, %v887
        %905 = vmatprep.subr.bf16.mxu0 0
        %906 = vmatpush1.bf16.msra.mxu0 %v889
        %907 = vmatprep.subr.bf16.mxu0 0
        %908 = vmatpush1.bf16.msra.mxu0 %v890
        %909 = vmatprep.subr.bf16.mxu0 0
        %910 = vmatpush1.bf16.msra.mxu0 %v891
        %911 = vmatprep.subr.bf16.mxu0 0
        %912 = vmatpush1.bf16.msra.mxu0 %v892
        %913 = vmatprep.subr.bf16.mxu0 0
        %914 = vmatpush1.bf16.msra.mxu0 %v893
        %915 = vmatprep.subr.bf16.mxu0 0
        %916 = vmatpush1.bf16.msra.mxu0 %v894
        %917 = vmatprep.subr.bf16.mxu0 0
        %918 = vmatpush1.bf16.msra.mxu0 %v895
        %919 = vmatprep.subr.bf16.mxu0 0
        %920 = vmatpush1.bf16.msra.mxu0 %v896
        %921 = vmatprep.subr.bf16.mxu0 0
        %922 = vmatpush1.bf16.msra.mxu0 0
        %923 = vmatprep.subr.bf16.mxu0 0
        %924 = vmatpush1.bf16.msra.mxu0 0
        %925 = vmatprep.subr.bf16.mxu0 0
        %926 = vmatpush1.bf16.msra.mxu0 0
        %927 = vmatprep.subr.bf16.mxu0 0
        %928 = vmatpush1.bf16.msra.mxu0 0
        %929 = vmatprep.subr.bf16.mxu0 0
        %930 = vmatpush1.bf16.msra.mxu0 0
        %931 = vmatprep.subr.bf16.mxu0 0
        %932 = vmatpush1.bf16.msra.mxu0 0
        %933 = vmatprep.subr.bf16.mxu0 0
        %934 = vmatpush1.bf16.msra.mxu0 0
        %935 = vmatprep.subr.bf16.mxu0 0
        %936 = vmatpush1.bf16.msra.mxu0 0
        %937 = vmatprep.mubr.bf16.mxu0 0
        %938 = vmatmul.mubr.bf16.gmra.mrb[0].mxu0 %v833
        %v939 = vpop.f32.mrb[0].mxu0
        %v940 = vadd.f32 %v855, %v939
        %v941 = vpop.f32.mrb[0].mxu0
        %v942 = vpop.f32.mrb[0].mxu0
        %v943 = vpop.f32.mrb[0].mxu0
        %944 = vdwg.mxu0
        %945 = vst [vmem:[%s405] sm:$0xff] %v940
        %s946 = sand.u32 %s230, 1
        %s947 = scalar_lea.sflag [#allocation4], %s946
        %s948 = sand.u32 %s230, 1
        %s949 = smul.addr %s948, 8
        %s950 = scalar_lea.vmem [#allocation11], %s949
        // Predicated region
        $region77: #{tpu_custom_call.1} parent=55 // pred_check
          %p951 = pneg %p240
        $region78: #{tpu_custom_call.1} parent=55 // pred_check_branch
          %953 = sbr.rel (%p951) target = $region80
        $region79: #{tpu_custom_call.1} parent=55 // pred_region
          %s955 = ssub.s32 128, 128
          %956 = vsyncadd %s947, %s955
          %s957 = smul.addr %s28, 128
          %s958 = scalar_lea.hbm %s9, %s957
          %s960 = sshll.u32 %s950, 4
          %s961 = int_to_ptr.vmem [resolvable:$true] %s960
          %963 = dma.vmem_to_hbm [thread:$0]  %s961, 128, %s958, %s947
        $region80: #{tpu_custom_call.1} parent=55 // pred_fallthru
          _
      $region56: #{tpu_custom_call.1} parent=5 // pred_fallthru
        _
      %p964 = scmp.le.s32.totalorder 2, %s23
      // Predicated region
      $region81: #{tpu_custom_call.1} parent=5 // pred_check
        %p965 = pneg %p964
      $region82: #{tpu_custom_call.1} parent=5 // pred_check_branch
        %967 = sbr.rel (%p965) target = $region84
      $region83: #{tpu_custom_call.1} parent=5 // pred_region
        %s968 = ssub.s32 %s23, 2
        // Predicated region
        $region85: #{tpu_custom_call.1} parent=83 // pred_check
          %p969 = pneg %p246
        $region86: #{tpu_custom_call.1} parent=83 // pred_check_branch
          %971 = sbr.rel (%p969) target = $region88
        $region87: #{tpu_custom_call.1} parent=83 // pred_region
          %s972 = sand.u32 %s231, 1
          %s973 = scalar_lea.sflag [#allocation4], %s972
          %s974 = sand.u32 %s231, 1
          %s975 = smul.addr %s974, 8
          %s976 = scalar_lea.vmem [#allocation11], %s975
          %977 = dma.done %s973, 128
        $region88: #{tpu_custom_call.1} parent=83 // pred_fallthru
          _
      $region84: #{tpu_custom_call.1} parent=5 // pred_fallthru
        _
    $region6: #{tpu_custom_call.1} parent=1 // loop_footer
      %s27 = sadd.s32 1, %s23
    $region7: #{tpu_custom_call.1} parent=1 // loop_footer_branch
      %22 = sbr.rel target = $region3
    $region8: #{tpu_custom_call.1} parent=1 // loop_exit
      _
    %978 = vsyncpa [#allocation3], 1
    %s979 = scalar_lea.sflag [#allocation3], 1
    %980 = vsyncpa %s979, 1
    %981 = vsyncpa [#allocation6], 1
    %982 = vsyncpa [#allocation9], 1
    %983 = vsyncpa [#allocation4], 1
    %s984 = scalar_lea.sflag [#allocation4], 1
    %985 = vsyncpa %s984, 1

</llo_original>
